<compile_context>
chip_gen: v6e
topology: v6e:2x2x1
jax: 0.10.0
libtpu: 0.0.40
codegen_flags: <defaults>
</compile_context>

<pallas_src>
import functools

import numpy as np

import jax
import jax.numpy as jnp
from jax.experimental import pallas as pl
from jax.experimental.pallas import tpu as pltpu


def _fsvar_kernel(blk_ref, x_ref, scale_ref, o_ref):
    # blk_ref (SMEM, scalar-prefetched) is consumed only by the index_maps.
    del blk_ref
    # One broadcast multiply per element; scale is a (block_rows, 1) column of
    # per-channel scalars, broadcast across the lane dimension.
    o_ref[...] = x_ref[...] * scale_ref[...]


def _cdiv(a, b):
    return -(-a // b)


def _pick_block(dim, align, cap):
    """Largest multiple of `align` <= min(cap, dim).

    If dim <= align, fall back to the full extent (the full-array-dim
    exception to the (8, 128) rule).  Remainders are handled by the cdiv grid
    + Pallas edge-block masking, never by an unbounded full-extent block.
    """
    if dim <= align:
        return dim
    b = min(cap, dim)
    b -= b % align
    return max(b, align)


def _build_tables(n, c, fast_c, slow_c, ratio, block_rows, dtype):
    """Per-row scale column + indices of row-blocks with a non-identity scale."""
    rows = n * c
    ch = np.arange(rows, dtype=np.int64) % c
    scale = np.ones(rows, dtype=np.float32)
    scale[ch < fast_c] *= np.float32(ratio)
    # NOTE: PyTorch `x[:, -slow_c:]` with slow_c == 0 selects *all* channels.
    slow_start = c - slow_c if slow_c > 0 else 0
    scale[ch >= slow_start] /= np.float32(ratio)

    # Overlapping fast/slow channels fold to exactly 1.0 and are skipped;
    # PyTorch computes (x*r)/r there, so results may differ by <=2 ulp.
    # Slow channels use x * (1/r) instead of x / r (<=1 ulp difference).
    touched = scale != np.float32(1.0)
    n_blocks = _cdiv(rows, block_rows)
    blk_ids = [b for b in range(n_blocks)
               if touched[b * block_rows:(b + 1) * block_rows].any()]
    return (np.asarray(blk_ids, dtype=np.int32),
            scale.reshape(rows, 1).astype(dtype))


@functools.partial(jax.jit, static_argnums=(1, 2, 3), donate_argnums=(0,))
def fsvar_forward(x, fast_channels, slow_channels, ratio=5):
    """FSVar forward. x: (N, C, H, W) float array -> same shape/dtype."""
    assert ratio >= 1, "ratio must be greater than or equal to 1"
    n, c, h, w = x.shape
    rows, cols = n * c, h * w
    x2d = x.reshape(rows, cols)               # bitcast under jit (row-major)

    itemsize = np.dtype(x.dtype).itemsize
    sub = max(8, 32 // itemsize)              # 8 for f32, 16 bf16, 32 int8/fp8
    budget_elems = (4 << 20) // itemsize      # ~4 MiB per block

    # Lane-dense first: take the widest multiple of 128 lanes within budget,
    # then let the row block shrink to fit.
    block_cols = _pick_block(cols, 128, budget_elems)
    block_rows = _pick_block(rows, sub, max(sub, budget_elems // block_cols))

    # v7x megacore: keep >= 2 grid steps when the tensor is big enough so
    # both TensorCores get work.
    if _cdiv(rows, block_rows) * _cdiv(cols, block_cols) < 2 and rows >= 2 * sub:
        half = block_rows // 2
        block_rows = max(sub, half - half % sub)

    blk_ids, scale_col = _build_tables(
        n, c, fast_channels, slow_channels, ratio, block_rows, x.dtype)
    if blk_ids.size == 0:                     # nothing to scale (e.g. ratio==1)
        return x

    grid = (int(blk_ids.size), _cdiv(cols, block_cols))

    out2d = pl.pallas_call(
        _fsvar_kernel,
        out_shape=jax.ShapeDtypeStruct((rows, cols), x.dtype),
        grid_spec=pltpu.PrefetchScalarGridSpec(
            num_scalar_prefetch=1,
            grid=grid,
            in_specs=[
                pl.BlockSpec((block_rows, block_cols),
                             lambda i, j, blk: (blk[i], j)),
                pl.BlockSpec((block_rows, 1),
                             lambda i, j, blk: (blk[i], 0)),
            ],
            out_specs=pl.BlockSpec((block_rows, block_cols),
                                   lambda i, j, blk: (blk[i], j)),
        ),
        # Operand order is (blk_ids, x2d, scale_col): alias x2d (index 1) to
        # the output so row-blocks we never visit keep their input values.
        input_output_aliases={1: 0},
        compiler_params=pltpu.CompilerParams(
            dimension_semantics=("parallel", "parallel"),
            vmem_limit_bytes=40 << 20,
        ),
    )(jnp.asarray(blk_ids), x2d, jnp.asarray(scale_col))

    return out2d.reshape(n, c, h, w)


def _fsvar_ref(x, fast_channels, slow_channels, ratio=5):
    """Pure-JAX reference mirroring the PyTorch in-place ops (incl. -0 quirk)."""
    c = x.shape[1]
    x = x.at[:, :fast_channels].multiply(ratio)
    slow_start = c - slow_channels if slow_channels > 0 else 0
    x = x.at[:, slow_start:].divide(ratio)
    return x


if __name__ == "__main__":
    key = jax.random.PRNGKey(0)
    N, C, H, W = 2, 4, 16, 16
    fast_channels, slow_channels, ratio = 2, 2, 5

    x = jax.random.normal(key, (N, C, H, W), dtype=jnp.float32)
    shape, dtype = x.shape, x.dtype

    # Reference first: the kernel call below donates x's buffer.
    ref = jax.block_until_ready(_fsvar_ref(x, fast_channels, slow_channels, ratio))

    out = fsvar_forward(x, fast_channels, slow_channels, ratio)
    out = jax.block_until_ready(out)

    assert out.shape == shape and out.dtype == dtype
    # Reciprocal-scale folding: allow ~1-2 ulp vs true divide.
    assert jnp.allclose(out, ref, rtol=1e-5, atol=1e-6)

    print("KERNEL_OK")
</pallas_src>

<mosaic_0001>
module attributes {stable_mosaic.version = 11 : i64} {
  func.func @_fsvar_kernel(%arg0: i32, %arg1: i32, %arg2: memref<1xi32, #tpu.memory_space<smem>>, %arg3: memref<8x256xf32, #tpu.memory_space<vmem>>, %arg4: memref<8x1xf32, #tpu.memory_space<vmem>>, %arg5: memref<8x256xf32, #tpu.memory_space<vmem>>) attributes {dimension_semantics = [#tpu.dimension_semantics<parallel>, #tpu.dimension_semantics<parallel>], iteration_bounds = array<i64: 1, 1>, scalar_prefetch = 1 : i64, scratch_operands = 0 : i64, tpu.core_type = #tpu.core_type<tc>, window_params = [{transform_indices = @transform_0, window_bounds = array<i64: 8, 256>}, {transform_indices = @transform_1, window_bounds = array<i64: 8, 1>}, {transform_indices = @transform_2, window_bounds = array<i64: 8, 256>}]} {
    %c0 = arith.constant 0 : index
    %c0_0 = arith.constant 0 : index
    %0 = vector.load %arg3[%c0, %c0_0] : memref<8x256xf32, #tpu.memory_space<vmem>>, vector<8x256xf32>
    %c0_1 = arith.constant 0 : index
    %c0_2 = arith.constant 0 : index
    %1 = vector.load %arg4[%c0_1, %c0_2] : memref<8x1xf32, #tpu.memory_space<vmem>>, vector<8x1xf32>
    %2 = vector.broadcast %1 : vector<8x1xf32> to vector<8x256xf32>
    %3 = arith.mulf %0, %2 : vector<8x256xf32>
    %c0_3 = arith.constant 0 : index
    %c0_4 = arith.constant 0 : index
    %4 = vector.load %arg5[%c0_3, %c0_4] : memref<8x256xf32, #tpu.memory_space<vmem>>, vector<8x256xf32>
    tpu.vector_store %arg5[%c0_3, %c0_4], %3 {strides = array<i32>} : memref<8x256xf32, #tpu.memory_space<vmem>>, vector<8x256xf32>,
    return
  }
  func.func @transform_0(%arg0: i32, %arg1: i32, %arg2: memref<1xi32, #tpu.memory_space<smem>>) -> (i32, i32) {
    %0 = arith.index_cast %arg0 : i32 to index
    %1 = memref.load %arg2[%0] : memref<1xi32, #tpu.memory_space<smem>>
    %c0_i32 = arith.constant 0 : i32
    return %1, %arg1 : i32, i32
  }
  func.func @transform_1(%arg0: i32, %arg1: i32, %arg2: memref<1xi32, #tpu.memory_space<smem>>) -> (i32, i32) {
    %0 = arith.index_cast %arg0 : i32 to index
    %1 = memref.load %arg2[%0] : memref<1xi32, #tpu.memory_space<smem>>
    %c0_i32 = arith.constant 0 : i32
    %c0_i32_0 = arith.constant 0 : i32
    return %1, %c0_i32 : i32, i32
  }
  func.func @transform_2(%arg0: i32, %arg1: i32, %arg2: memref<1xi32, #tpu.memory_space<smem>>) -> (i32, i32) {
    %0 = arith.index_cast %arg0 : i32 to index
    %1 = memref.load %arg2[%0] : memref<1xi32, #tpu.memory_space<smem>>
    %c0_i32 = arith.constant 0 : i32
    return %1, %arg1 : i32, i32
  }
}

</mosaic_0001>

<llo_original>
// kernel: fsvar_forward.1
$region0: #{fsvar_forward.1}
  #allocation0 [shape = 'u32[]', space=smem, size = 0x4, offset = 0x4, fixed_abs, tag = 'smem constant byte address 0x4 - core index']
  #allocation1 [shape = 'u32[144,128]{1,0:T(1,128)}', space=vmem, size = 0x12000, scoped, tag = 'internal scratch']
  #allocation2 [shape = 's32[1]{0}', space=sflag, size = 0x4, scoped, tag = 'scoped memory for fsvar_forward.1']
  #allocation3 [shape = 's32[1]{0:T(128)S(6)}', space=smem, size = 0x200, scoped, tag = 'prefetched SMEM operand 0']
  %s0 = inlined_call_operand.<no memory space> [shape: s32[1], index: 0, kind: input, shape index: {}]
  %s1 = inlined_call_operand.vmem [shape: f32[8,256], index: 1, kind: input, shape index: {}, may-alias: {1,3}]
  %s2 = inlined_call_operand.vmem [shape: f32[8,1], index: 2, kind: input, shape index: {}]
  %s3 = inlined_call_operand.vmem [shape: f32[8,256], index: 3, kind: output, shape index: {}, may-alias: {1,3}]
  %s4 = sld [smem:[#allocation0]]
  $region18: #{fsvar_forward.1} parent=0
    _
  %s6 = ssub.s32 1, %s4
  %s7 = scalar_select 0, %s6, %s4
  %8 = sst [smem:[#allocation3]] %s0
  // Predicated region
  $region2: #{fsvar_forward.1} parent=0 // pred_check
    _
  $region3: #{fsvar_forward.1} parent=0 // pred_check_branch
    %10 = sbr.rel (0) target = $region5
  $region4: #{fsvar_forward.1} parent=0 // pred_region
    %s11 = sld [smem:[#allocation3]]
    %p12 = scmp.lt.s32.totalorder %s11, 0
    %s13 = scalar_select %p12, %s11, 0
    %s14 = smul.addr %s13, 2
    %s15 = smul.addr %s14, 8
    %s16 = scalar_lea.vmem %s1, %s15
    %s17 = sld [smem:[#allocation3]]
  $region5: #{fsvar_forward.1} parent=0 // pred_fallthru
    _
  // Predicated region
  $region6: #{fsvar_forward.1} parent=0 // pred_check
    _
  $region7: #{fsvar_forward.1} parent=0 // pred_check_branch
    %19 = sbr.rel (0) target = $region9
  $region8: #{fsvar_forward.1} parent=0 // pred_region
    %s20 = sld [smem:[#allocation3]]
    %p21 = scmp.lt.s32.totalorder %s20, 0
    %s22 = scalar_select %p21, %s20, 0
    %s23 = smul.addr %s22, 8
    %s24 = scalar_lea.vmem %s2, %s23
    %s25 = sld [smem:[#allocation3]]
  $region9: #{fsvar_forward.1} parent=0 // pred_fallthru
    _
  %s26 = sld [smem:[#allocation3]]
  %p27 = scmp.lt.s32.totalorder %s26, 0
  %s28 = scalar_select %p27, %s26, 0
  %s29 = smul.addr %s28, 2
  %s30 = smul.addr %s29, 8
  %s31 = scalar_lea.vmem %s1, %s30
  %s32 = sld [smem:[#allocation3]]
  %p33 = scmp.lt.s32.totalorder %s32, 0
  %s34 = scalar_select %p33, %s32, 0
  %s35 = smul.addr %s34, 8
  %s36 = scalar_lea.vmem %s2, %s35
  %s37 = sld [smem:[#allocation3]]
  %p38 = scmp.lt.s32.totalorder %s37, 0
  %s39 = scalar_select %p38, %s37, 0
  %s40 = smul.addr %s39, 2
  %s41 = smul.addr %s40, 8
  %s42 = scalar_lea.vmem %s3, %s41
  %s43 = sld [smem:[#allocation3]]
  %p44 = scmp.lt.s32.totalorder %s43, 0
  %s45 = scalar_select %p44, %s43, 0
  %s46 = smul.addr %s45, 2
  %s47 = smul.addr %s46, 8
  %s48 = scalar_lea.vmem %s1, %s47
  %s49 = sld [smem:[#allocation3]]
  %s50 = sld [smem:[#allocation3]]
  %p51 = scmp.lt.s32.totalorder %s50, 0
  %s52 = scalar_select %p51, %s50, 0
  %s53 = smul.addr %s52, 8
  %s54 = scalar_lea.vmem %s2, %s53
  %s55 = sld [smem:[#allocation3]]
  %s56 = sld [smem:[#allocation3]]
  %p57 = scmp.lt.s32.totalorder %s56, 0
  %s58 = scalar_select %p57, %s56, 0
  %s59 = smul.addr %s58, 2
  %s60 = smul.addr %s59, 8
  %s61 = scalar_lea.vmem %s3, %s60
  %s62 = sld [smem:[#allocation3]]
  %v63 = vld [vmem:[%s48] sm:$0xff]
  %v64 = vld [vmem:[%s48 + $0x8] sm:$0xff]
  %v65 = vld [vmem:[%s54] sm:$0xff]
  %67 = vset.pattern.permute.xlu0 0
  %68 = vperm.xlu0 %67, %v65
  %v69 = vpop.permute.xlu0 %68
  %v71 = vmul.f32 %v63, %v69
  %v72 = vmul.f32 %v64, %v69
  %73 = vst [vmem:[%s61] sm:$0xff] %v71
  %74 = vst [vmem:[%s61 + $0x8] sm:$0xff] %v72
  %s75 = sld [smem:[#allocation3]]
  %p76 = scmp.lt.s32.totalorder %s75, 0
  %s77 = scalar_select %p76, %s75, 0
  %s78 = smul.addr %s77, 2
  %s79 = smul.addr %s78, 8
  %s80 = scalar_lea.vmem %s3, %s79
  // Predicated region
  $region10: #{fsvar_forward.1} parent=0 // pred_check
    _
  $region11: #{fsvar_forward.1} parent=0 // pred_check_branch
    %82 = sbr.rel (0) target = $region13
  $region12: #{fsvar_forward.1} parent=0 // pred_region
    %s83 = sld [smem:[#allocation3]]
  $region13: #{fsvar_forward.1} parent=0 // pred_fallthru
    _
  // Predicated region
  $region14: #{fsvar_forward.1} parent=0 // pred_check
    _
  $region15: #{fsvar_forward.1} parent=0 // pred_check_branch
    %85 = sbr.rel (0) target = $region17
  $region16: #{fsvar_forward.1} parent=0 // pred_region
    %s86 = sld [smem:[#allocation3]]
    %p87 = scmp.lt.s32.totalorder %s86, 0
    %s88 = scalar_select %p87, %s86, 0
    %s89 = smul.addr %s88, 2
    %s90 = smul.addr %s89, 8
    %s91 = scalar_lea.vmem %s3, %s90
  $region17: #{fsvar_forward.1} parent=0 // pred_fallthru
    _

</llo_original>
